<compile_context>
chip_gen: v5e
topology: v5e:2x2
jax: 0.10.0
libtpu: 0.0.40
codegen_flags: <defaults>
</compile_context>

<pallas_src>
import functools
import math

import jax
import jax.numpy as jnp
from jax import lax
from jax.experimental import pallas as pl
from jax.experimental.pallas import tpu as pltpu

_VMEM_LIMIT = 32 * 1024 * 1024  # safe on v7x (64 MiB phys), fine on v5e/v6e


def _default_token_tile():
    """Bigger token tiles on 128 MiB-VMEM parts (v5e/v6e); modest on v7x (64 MiB)."""
    try:
        if pltpu.get_tpu_info().vmem_capacity_bytes <= 64 * 1024 * 1024:
            return 512
    except Exception:
        pass
    return 1024


# ---------------------------------------------------------------------------
# Linear projection kernels (token axis tiled, weights resident in VMEM)
# ---------------------------------------------------------------------------

def _linear_kernel(x_ref, w_ref, o_ref):
    o_ref[...] = jnp.dot(
        x_ref[...], w_ref[...], preferred_element_type=jnp.float32
    ).astype(o_ref.dtype)


def _linear_bias_kernel(x_ref, w_ref, b_ref, o_ref):
    acc = jnp.dot(x_ref[...], w_ref[...], preferred_element_type=jnp.float32)
    o_ref[...] = (acc + b_ref[...]).astype(o_ref.dtype)


def _kv_proj_kernel(x_ref, wk_ref, wv_ref, k_ref, v_ref):
    # One read of the context token tile feeds both projections.
    x = x_ref[...]
    k_ref[...] = jnp.dot(x, wk_ref[...],
                         preferred_element_type=jnp.float32).astype(k_ref.dtype)
    v_ref[...] = jnp.dot(x, wv_ref[...],
                         preferred_element_type=jnp.float32).astype(v_ref.dtype)


def linear(x2d, w, b=None, *, out_dtype=None, tm_target=None):
    """x2d:[T,Din] @ w:[Din,Dout] (+ b:[1,Dout]) -> [T,Dout]."""
    t, din = x2d.shape
    dout = w.shape[1]
    out_dtype = x2d.dtype if out_dtype is None else out_dtype
    tm_target = _default_token_tile() if tm_target is None else tm_target
    tm = t if t <= tm_target else tm_target
    grid = (pl.cdiv(t, tm),)

    itemsize = jnp.dtype(x2d.dtype).itemsize
    cost = pl.CostEstimate(
        flops=2 * t * din * dout,
        transcendentals=0,
        bytes_accessed=(t * din + din * dout + t * dout
                        + (dout if b is not None else 0)) * itemsize)

    in_specs = [
        pl.BlockSpec((tm, din), lambda i: (i, 0)),      # streamed token tiles
        pl.BlockSpec((din, dout), lambda i: (0, 0)),    # weights resident
    ]
    args = [x2d, w]
    kernel = _linear_kernel
    if b is not None:
        in_specs.append(pl.BlockSpec((1, dout), lambda i: (0, 0)))
        args.append(b)
        kernel = _linear_bias_kernel

    return pl.pallas_call(
        kernel,
        out_shape=jax.ShapeDtypeStruct((t, dout), out_dtype),
        grid_spec=pltpu.PrefetchScalarGridSpec(
            num_scalar_prefetch=0,
            grid=grid,
            in_specs=in_specs,
            out_specs=pl.BlockSpec((tm, dout), lambda i: (i, 0)),
        ),
        compiler_params=pltpu.CompilerParams(
            dimension_semantics=("parallel",),
            vmem_limit_bytes=_VMEM_LIMIT),
        cost_estimate=cost,
    )(*args)


def linear_kv_fused(x2d, wk, wv, *, out_dtype, tm_target=None):
    """Fused to_k / to_v: x2d:[T,Dc] -> (k:[T,inner], v:[T,inner])."""
    t, din = x2d.shape
    inner = wk.shape[1]
    tm_target = _default_token_tile() if tm_target is None else tm_target
    tm = t if t <= tm_target else tm_target
    grid = (pl.cdiv(t, tm),)

    itemsize = jnp.dtype(x2d.dtype).itemsize
    cost = pl.CostEstimate(
        flops=4 * t * din * inner,
        transcendentals=0,
        bytes_accessed=(t * din + 2 * din * inner + 2 * t * inner) * itemsize)

    return pl.pallas_call(
        _kv_proj_kernel,
        out_shape=(jax.ShapeDtypeStruct((t, inner), out_dtype),
                   jax.ShapeDtypeStruct((t, inner), out_dtype)),
        grid_spec=pltpu.PrefetchScalarGridSpec(
            num_scalar_prefetch=0,
            grid=grid,
            in_specs=[pl.BlockSpec((tm, din), lambda i: (i, 0)),
                      pl.BlockSpec((din, inner), lambda i: (0, 0)),
                      pl.BlockSpec((din, inner), lambda i: (0, 0))],
            out_specs=(pl.BlockSpec((tm, inner), lambda i: (i, 0)),
                       pl.BlockSpec((tm, inner), lambda i: (i, 0))),
        ),
        compiler_params=pltpu.CompilerParams(
            dimension_semantics=("parallel",),
            vmem_limit_bytes=_VMEM_LIMIT),
        cost_estimate=cost,
    )(x2d, wk, wv)


# ---------------------------------------------------------------------------
# Multi-head attention on the packed [B, N, heads*dh] layout
# ---------------------------------------------------------------------------

def _heads_per_block(heads, dim_head):
    """Smallest head-group count whose packed width is a multiple of 128 lanes."""
    for hb in range(1, heads + 1):
        if heads % hb == 0 and (hb * dim_head) % 128 == 0:
            return hb
    return heads  # full inner dim (== full last array dim, always legal)


def _mha_onetile_kernel(q_ref, k_ref, v_ref, o_ref, *, scale, hb, dh):
    """Single kv tile: direct softmax, no online-softmax bookkeeping."""
    q = q_ref[0] * scale                       # (tq, hb*dh) bf16, scale folded in
    k = k_ref[0]                               # (tk, hb*dh)
    v = v_ref[0]
    parts = []
    for h in range(hb):
        sl = slice(h * dh, (h + 1) * dh)
        s = lax.dot_general(q[:, sl], k[:, sl],
                            (((1,), (1,)), ((), ())),
                            preferred_element_type=jnp.float32)     # (tq, tk)
        m = jnp.max(s, axis=-1, keepdims=True)
        p = jnp.exp(s - m)
        l = jnp.sum(p, axis=-1, keepdims=True)
        pv = lax.dot_general(p.astype(v.dtype), v[:, sl],
                             (((1,), (0,)), ((), ())),
                             preferred_element_type=jnp.float32)    # (tq, dh)
        parts.append(pv * pl.reciprocal(l, approx=True))
    # One lane-dense store of the whole head group.
    o_ref[0] = jnp.concatenate(parts, axis=-1).astype(o_ref.dtype)


def _mha_flash_kernel(q_ref, k_ref, v_ref, o_ref, m_sc, l_sc, acc_sc, *,
                      scale, hb, dh, nk, tk):
    """Flash-style online softmax over the kv (innermost, 'arbitrary') axis."""
    ki = pl.program_id(3)

    @pl.when(ki == 0)
    def _():
        m_sc[...] = jnp.full_like(m_sc, -jnp.inf)
        l_sc[...] = jnp.zeros_like(l_sc)
        acc_sc[...] = jnp.zeros_like(acc_sc)

    q = q_ref[0] * scale                       # (tq, hb*dh) bf16
    k = k_ref[0]                               # (tk, hb*dh)
    v = v_ref[0]

    ragged = (nk % tk) != 0                    # static; last kv tile overhangs
    if ragged:
        first = ki * tk
        col_valid = (first + lax.broadcasted_iota(jnp.int32, (1, tk), 1)) < nk
        row_valid = (first + lax.broadcasted_iota(jnp.int32, (tk, 1), 0)) < nk
        v = jnp.where(row_valid, v, jnp.zeros_like(v))   # keep padded rows finite

    for h in range(hb):
        sl = slice(h * dh, (h + 1) * dh)
        s = lax.dot_general(q[:, sl], k[:, sl],
                            (((1,), (1,)), ((), ())),
                            preferred_element_type=jnp.float32)     # (tq, tk)
        if ragged:
            s = jnp.where(col_valid, s, -jnp.inf)
        m_prev = m_sc[h]
        m_new = jnp.maximum(m_prev, jnp.max(s, axis=-1, keepdims=True))
        alpha = jnp.exp(m_prev - m_new)
        p = jnp.exp(s - m_new)
        l_sc[h] = alpha * l_sc[h] + jnp.sum(p, axis=-1, keepdims=True)
        acc_sc[h] = alpha * acc_sc[h] + lax.dot_general(
            p.astype(v.dtype), v[:, sl],
            (((1,), (0,)), ((), ())),
            preferred_element_type=jnp.float32)
        m_sc[h] = m_new

    @pl.when(ki == pl.num_programs(3) - 1)
    def _():
        parts = [acc_sc[h] * pl.reciprocal(l_sc[h], approx=True)
                 for h in range(hb)]
        o_ref[0] = jnp.concatenate(parts, axis=-1).astype(o_ref.dtype)


def multihead_attention(q, k, v, *, heads, scale,
                        tq_target=128, tk_target=256, one_tile_max=512):
    """q:[B,Nq,inner], k/v:[B,Nk,inner] (packed 'b n (h d)') -> [B,Nq,inner]."""
    b, nq, inner = q.shape
    nk = k.shape[1]
    dh = inner // heads
    hb = _heads_per_block(heads, dh)           # heads per grid cell
    w = hb * dh                                # lane-dense block width (>=128)
    hg = inner // w                            # number of head groups
    tq = nq if nq <= tq_target else tq_target
    nqt = pl.cdiv(nq, tq)

    itemsize = jnp.dtype(q.dtype).itemsize
    cost = pl.CostEstimate(
        flops=4 * b * heads * nq * nk * dh,
        transcendentals=b * heads * nq * nk,
        bytes_accessed=(2 * q.size + k.size + v.size) * itemsize)

    if nk <= one_tile_max:
        # Single kv tile: no online-softmax machinery, no scratch.
        tk = nk
        grid = (b, hg, nqt)
        kernel = functools.partial(_mha_onetile_kernel, scale=scale, hb=hb, dh=dh)
        in_specs = [
            pl.BlockSpec((1, tq, w), lambda bb, hi, qi: (bb, qi, hi)),
            pl.BlockSpec((1, tk, w), lambda bb, hi, qi: (bb, 0, hi)),
            pl.BlockSpec((1, tk, w), lambda bb, hi, qi: (bb, 0, hi)),
        ]
        out_specs = pl.BlockSpec((1, tq, w), lambda bb, hi, qi: (bb, qi, hi))
        scratch = []
        dims = ("parallel", "parallel", "parallel")
    else:
        tk = tk_target
        grid = (b, hg, nqt, pl.cdiv(nk, tk))
        kernel = functools.partial(_mha_flash_kernel, scale=scale, hb=hb, dh=dh,
                                   nk=nk, tk=tk)
        in_specs = [
            pl.BlockSpec((1, tq, w), lambda bb, hi, qi, ki: (bb, qi, hi)),
            pl.BlockSpec((1, tk, w), lambda bb, hi, qi, ki: (bb, ki, hi)),
            pl.BlockSpec((1, tk, w), lambda bb, hi, qi, ki: (bb, ki, hi)),
        ]
        out_specs = pl.BlockSpec((1, tq, w), lambda bb, hi, qi, ki: (bb, qi, hi))
        scratch = [pltpu.VMEM((hb, tq, 1), jnp.float32),    # running max
                   pltpu.VMEM((hb, tq, 1), jnp.float32),    # running sum
                   pltpu.VMEM((hb, tq, dh), jnp.float32)]   # output accumulator
        dims = ("parallel", "parallel", "parallel", "arbitrary")

    return pl.pallas_call(
        kernel,
        out_shape=jax.ShapeDtypeStruct((b, nq, inner), q.dtype),
        grid_spec=pltpu.PrefetchScalarGridSpec(
            num_scalar_prefetch=0,
            grid=grid,
            in_specs=in_specs,
            out_specs=out_specs,
            scratch_shapes=scratch,
        ),
        compiler_params=pltpu.CompilerParams(
            dimension_semantics=dims,
            vmem_limit_bytes=_VMEM_LIMIT),
        cost_estimate=cost,
    )(q, k, v)


# ---------------------------------------------------------------------------
# CrossAttention forward
# ---------------------------------------------------------------------------

def cross_attention(x, context, params, *, heads, compute_dtype=jnp.bfloat16):
    """x:[B,N,Dq], context:[B,M,Dc] or None (self-attention)."""
    # TODO(synk): optional boolean `mask` (sim.masked_fill_) not implemented;
    # it would be an additive -inf bias on the logits in the attention kernels.
    wq, wk, wv, wo, bo = params
    if context is None:
        context = x
    b, n, dq = x.shape
    m, dc = context.shape[1], context.shape[2]
    inner = wq.shape[1]
    dh = inner // heads
    scale = dh ** (-0.5)

    # bf16 MXU operands with f32 accumulation; activations stay bf16 between
    # kernels (halves HBM traffic).  Softmax stats remain f32 inside the kernel.
    xc = x.astype(compute_dtype).reshape(b * n, dq)
    cc = context.astype(compute_dtype).reshape(b * m, dc)
    wq_c = wq.astype(compute_dtype)
    wk_c = wk.astype(compute_dtype)
    wv_c = wv.astype(compute_dtype)
    wo_c = wo.astype(compute_dtype)

    q = linear(xc, wq_c, out_dtype=compute_dtype).reshape(b, n, inner)
    k2d, v2d = linear_kv_fused(cc, wk_c, wv_c, out_dtype=compute_dtype)
    k = k2d.reshape(b, m, inner)
    v = v2d.reshape(b, m, inner)

    # Heads stay packed along the lane dim; the attention BlockSpecs pick head
    # groups directly, so there are no split/merge-head transposes.
    out = multihead_attention(q, k, v, heads=heads, scale=scale)

    # to_out: Linear(inner, query_dim) + Dropout(p=0.0) == identity in eval.
    y = linear(out.reshape(b * n, inner), wo_c, bo.astype(jnp.float32),
               out_dtype=x.dtype)
    return y.reshape(b, n, wo.shape[1])


def init_cross_attention_params(key, query_dim, context_dim=None, heads=8,
                                dim_head=64, dtype=jnp.float32):
    """Matches nn.Linear default init (+/- 1/sqrt(fan_in)); weights stored [in,out]."""
    inner = heads * dim_head
    context_dim = query_dim if context_dim is None else context_dim
    kq, kk, kv, ko, kb = jax.random.split(key, 5)
    bq = 1.0 / math.sqrt(query_dim)
    bc = 1.0 / math.sqrt(context_dim)
    bi = 1.0 / math.sqrt(inner)
    wq = jax.random.uniform(kq, (query_dim, inner), dtype, -bq, bq)
    wk = jax.random.uniform(kk, (context_dim, inner), dtype, -bc, bc)
    wv = jax.random.uniform(kv, (context_dim, inner), dtype, -bc, bc)
    wo = jax.random.uniform(ko, (inner, query_dim), dtype, -bi, bi)
    bo = jax.random.uniform(kb, (1, query_dim), dtype, -bi, bi)
    return wq, wk, wv, wo, bo


def cross_attention_ref(x, context, params, *, heads):
    """Plain-JAX f32 reference mirroring the PyTorch forward."""
    wq, wk, wv, wo, bo = params
    b, n, _ = x.shape
    inner = wq.shape[1]
    dh = inner // heads
    q = (x @ wq).reshape(b, n, heads, dh)
    k = (context @ wk).reshape(b, -1, heads, dh)
    v = (context @ wv).reshape(b, -1, heads, dh)
    sim = jnp.einsum('bihd,bjhd->bhij', q, k) * (dh ** -0.5)
    attn = jax.nn.softmax(sim, axis=-1)
    out = jnp.einsum('bhij,bjhd->bihd', attn, v).reshape(b, n, inner)
    return out @ wo + bo


if __name__ == "__main__":
    key = jax.random.PRNGKey(0)
    kx, kc, kp, ks, kp2 = jax.random.split(key, 5)

    # 1) Cross-attention: CrossAttention(query_dim=128, context_dim=64,
    #    heads=4, dim_head=32); x:[2,8,128], context:[2,16,64].
    #    Exercises the single-kv-tile fast path.
    batch, n_q, n_kv = 2, 8, 16
    query_dim, context_dim, heads, dim_head = 128, 64, 4, 32
    x = jax.random.normal(kx, (batch, n_q, query_dim), jnp.float32)
    context = jax.random.normal(kc, (batch, n_kv, context_dim), jnp.float32)
    params = init_cross_attention_params(kp, query_dim, context_dim, heads, dim_head)

    out = cross_attention(x, context, params, heads=heads)
    jax.block_until_ready(out)
    ref = cross_attention_ref(x, context, params, heads=heads)
    assert out.shape == ref.shape, f"shape mismatch {out.shape} vs {ref.shape}"
    assert jnp.allclose(out, ref, atol=2e-2, rtol=2e-2), (
        f"cross-attn mismatch, max abs diff = {jnp.max(jnp.abs(out - ref))}")

    # 2) Self-attention (context=None) at a longer sequence: exercises the
    #    multi-kv-tile online-softmax path with a ragged last kv tile.
    n_long = 640
    params_sa = init_cross_attention_params(kp2, query_dim, None, heads, dim_head)
    x2 = jax.random.normal(ks, (batch, n_long, query_dim), jnp.float32)
    out2 = cross_attention(x2, None, params_sa, heads=heads)
    jax.block_until_ready(out2)
    ref2 = cross_attention_ref(x2, x2, params_sa, heads=heads)
    assert out2.shape == ref2.shape
    assert jnp.allclose(out2, ref2, atol=2e-2, rtol=2e-2), (
        f"self-attn mismatch, max abs diff = {jnp.max(jnp.abs(out2 - ref2))}")

    print("KERNEL_OK")
</pallas_src>

<mosaic_0001>
module attributes {stable_mosaic.version = 11 : i64} {
  func.func @_linear_kernel(%arg0: i32, %arg1: memref<16x128xbf16, #tpu.memory_space<vmem>>, %arg2: memref<128x128xbf16, #tpu.memory_space<vmem>>, %arg3: memref<16x128xbf16, #tpu.memory_space<vmem>>) attributes {dimension_semantics = [#tpu.dimension_semantics<parallel>], iteration_bounds = array<i64: 1>, scalar_prefetch = 0 : i64, scratch_operands = 0 : i64, tpu.core_type = #tpu.core_type<tc>, window_params = [{transform_indices = @transform_0, window_bounds = array<i64: 16, 128>}, {pipeline_mode = #tpu.pipeline_mode<synchronous>, transform_indices = @transform_1, window_bounds = array<i64: 128, 128>}, {transform_indices = @transform_2, window_bounds = array<i64: 16, 128>}]} {
    %c0 = arith.constant 0 : index
    %c0_0 = arith.constant 0 : index
    %0 = vector.load %arg1[%c0, %c0_0] : memref<16x128xbf16, #tpu.memory_space<vmem>>, vector<16x128xbf16>
    %c0_1 = arith.constant 0 : index
    %c0_2 = arith.constant 0 : index
    %1 = vector.load %arg2[%c0_1, %c0_2] : memref<128x128xbf16, #tpu.memory_space<vmem>>, vector<128x128xbf16>
    %cst = arith.constant dense<0.000000e+00> : vector<16x128xf32>
    %2 = tpu.matmul %0, %1, %cst {dimension_numbers = #tpu.dot_dimension_numbers<[1], [0], [0], [1], [0, 0, 1, 1], [], []>} : vector<16x128xbf16>, vector<128x128xbf16>, vector<16x128xf32> -> vector<16x128xf32>
    %3 = arith.truncf %2 : vector<16x128xf32> to vector<16x128xbf16>
    %c0_3 = arith.constant 0 : index
    %c0_4 = arith.constant 0 : index
    %4 = vector.load %arg3[%c0_3, %c0_4] : memref<16x128xbf16, #tpu.memory_space<vmem>>, vector<16x128xbf16>
    tpu.vector_store %arg3[%c0_3, %c0_4], %3 {strides = array<i32>} : memref<16x128xbf16, #tpu.memory_space<vmem>>, vector<16x128xbf16>,
    return
  }
  func.func @transform_0(%arg0: i32) -> (i32, i32) {
    %c0_i32 = arith.constant 0 : i32
    %c0_i32_0 = arith.constant 0 : i32
    return %arg0, %c0_i32 : i32, i32
  }
  func.func @transform_1(%arg0: i32) -> (i32, i32) {
    %c0_i32 = arith.constant 0 : i32
    %c0_i32_0 = arith.constant 0 : i32
    %c0_i32_1 = arith.constant 0 : i32
    return %c0_i32, %c0_i32_0 : i32, i32
  }
  func.func @transform_2(%arg0: i32) -> (i32, i32) {
    %c0_i32 = arith.constant 0 : i32
    %c0_i32_0 = arith.constant 0 : i32
    return %arg0, %c0_i32 : i32, i32
  }
}

</mosaic_0001>

<llo_original>
// kernel: tpu_custom_call.1
$region0: #{tpu_custom_call.1}
  #allocation0 [shape = 'u32[]', space=smem, size = 0x4, offset = 0x4, fixed_abs, tag = 'smem constant byte address 0x4 - core index']
  #allocation1 [shape = 'u32[72,128]{1,0:T(1,128)}', space=vmem, size = 0x9000, scoped, tag = 'internal scratch']
  %s0 = inlined_call_operand.hbm [shape: bf16[16,128], index: 0, kind: input, shape index: {}]
  %s1 = inlined_call_operand.hbm [shape: bf16[128,128], index: 1, kind: input, shape index: {}]
  %s2 = inlined_call_operand.hbm [shape: bf16[16,128], index: 2, kind: output, shape index: {}]
  %s3 = sld [smem:[#allocation0]]
  $region26: #{tpu_custom_call.1} parent=0
    _
  %s5 = ssub.s32 1, %s3
  %s6 = scalar_select 0, %s5, %s3
  $region1: #{tpu_custom_call.1} parent=0
    #allocation2 [shape = 'u8[4096]{0}', space=vmem, size = 0x1000, scoped, tag = 'input window, operand 0, single buffered']
    #allocation3 [shape = 's32[1]{0}', space=sflag, size = 0x4, scoped, tag = 'scoped memory for tpu_custom_call.1']
    #allocation4 [shape = 's32[1]{0}', space=sflag, size = 0x4, scoped, tag = 'scoped memory for tpu_custom_call.1']
    #allocation5 [shape = 'u8[32768]{0}', space=vmem, size = 0x8000, scoped, tag = 'input window, operand 1, single buffered']
    #allocation6 [shape = 's32[1]{0}', space=sflag, size = 0x4, scoped, tag = 'scoped memory for tpu_custom_call.1']
    #allocation7 [shape = 'u8[4096]{0}', space=vmem, size = 0x1000, scoped, tag = 'output window, operand 0, single buffered']
    %7 = vsyncpa [#allocation3], 0
    %8 = vsyncpa [#allocation6], 0
    %9 = vsyncpa [#allocation4], 0
    // Predicated region
    $region2: #{tpu_custom_call.1} parent=1 // pred_check
      _
    $region3: #{tpu_custom_call.1} parent=1 // pred_check_branch
      %11 = sbr.rel (0) target = $region5
    $region4: #{tpu_custom_call.1} parent=1 // pred_region
      %13 = vsyncadd [#allocation3], 0
      %s14 = sshll.u32 %s0, 4
      %s15 = int_to_ptr.hbm [resolvable:$true] %s14
      %s16 = sshll.u32 [#allocation2], 4
      %s17 = int_to_ptr.vmem [resolvable:$true] %s16
      %22 = dma.hbm_to_vmem [thread:$0]  %s15, 128, %s17, [#allocation3], 64, 64, 4
    $region5: #{tpu_custom_call.1} parent=1 // pred_fallthru
      _
    // Predicated region
    $region6: #{tpu_custom_call.1} parent=1 // pred_check
      _
    $region7: #{tpu_custom_call.1} parent=1 // pred_check_branch
      %24 = sbr.rel (0) target = $region9
    $region8: #{tpu_custom_call.1} parent=1 // pred_region
      %26 = vsyncadd [#allocation6], 0
      %s27 = sshll.u32 %s1, 4
      %s28 = int_to_ptr.hbm [resolvable:$true] %s27
      %s29 = sshll.u32 [#allocation5], 4
      %s30 = int_to_ptr.vmem [resolvable:$true] %s29
      %35 = dma.hbm_to_vmem [thread:$0]  %s28, 1024, %s30, [#allocation6], 64, 64, 4
    $region9: #{tpu_custom_call.1} parent=1 // pred_fallthru
      _
    // Predicated region
    $region10: #{tpu_custom_call.1} parent=1 // pred_check
      _
    $region11: #{tpu_custom_call.1} parent=1 // pred_check_branch
      %37 = sbr.rel (0) target = $region13
    $region12: #{tpu_custom_call.1} parent=1 // pred_region
      %39 = dma.done [#allocation3], 128
    $region13: #{tpu_custom_call.1} parent=1 // pred_fallthru
      _
    // Predicated region
    $region14: #{tpu_custom_call.1} parent=1 // pred_check
      _
    $region15: #{tpu_custom_call.1} parent=1 // pred_check_branch
      %41 = sbr.rel (0) target = $region17
    $region16: #{tpu_custom_call.1} parent=1 // pred_region
      %43 = dma.done [#allocation6], 1024
    $region17: #{tpu_custom_call.1} parent=1 // pred_fallthru
      _
    %v44 = vld [vmem:[#allocation2] sm:$0xf]
    %v45 = vld [vmem:[#allocation2 + $0x4] sm:$0xf]
    %v46 = vld [vmem:[#allocation5] sm:$0xf]
    %v47 = vld [vmem:[#allocation5 + $0x4] sm:$0xf]
    %v48 = vld [vmem:[#allocation5 + $0x8] sm:$0xf]
    %v49 = vld [vmem:[#allocation5 + $0xc] sm:$0xf]
    %v50 = vld [vmem:[#allocation5 + $0x10] sm:$0xf]
    %v51 = vld [vmem:[#allocation5 + $0x14] sm:$0xf]
    %v52 = vld [vmem:[#allocation5 + $0x18] sm:$0xf]
    %v53 = vld [vmem:[#allocation5 + $0x1c] sm:$0xf]
    %v54 = vld [vmem:[#allocation5 + $0x20] sm:$0xf]
    %v55 = vld [vmem:[#allocation5 + $0x24] sm:$0xf]
    %v56 = vld [vmem:[#allocation5 + $0x28] sm:$0xf]
    %v57 = vld [vmem:[#allocation5 + $0x2c] sm:$0xf]
    %v58 = vld [vmem:[#allocation5 + $0x30] sm:$0xf]
    %v59 = vld [vmem:[#allocation5 + $0x34] sm:$0xf]
    %v60 = vld [vmem:[#allocation5 + $0x38] sm:$0xf]
    %v61 = vld [vmem:[#allocation5 + $0x3c] sm:$0xf]
    %v64 = vunpack.c.l.b16 %v44
    %v65 = vunpack.c.l.b16 %v45
    %v66 = vpack.c.b16 %v65, %v64
    %v84 = vunpack.c.l.b16 %v46
    %v85 = vunpack.c.l.b16 %v47
    %v86 = vunpack.c.l.b16 %v48
    %v87 = vunpack.c.l.b16 %v49
    %v88 = vunpack.c.l.b16 %v50
    %v89 = vunpack.c.l.b16 %v51
    %v90 = vunpack.c.l.b16 %v52
    %v91 = vunpack.c.l.b16 %v53
    %v92 = vunpack.c.l.b16 %v54
    %v93 = vunpack.c.l.b16 %v55
    %v94 = vunpack.c.l.b16 %v56
    %v95 = vunpack.c.l.b16 %v57
    %v96 = vunpack.c.l.b16 %v58
    %v97 = vunpack.c.l.b16 %v59
    %v98 = vunpack.c.l.b16 %v60
    %v99 = vunpack.c.l.b16 %v61
    %v100 = vpack.c.b16 %v85, %v84
    %v101 = vpack.c.b16 %v87, %v86
    %v102 = vpack.c.b16 %v89, %v88
    %v103 = vpack.c.b16 %v91, %v90
    %v104 = vpack.c.b16 %v93, %v92
    %v105 = vpack.c.b16 %v95, %v94
    %v106 = vpack.c.b16 %v97, %v96
    %v107 = vpack.c.b16 %v99, %v98
    %116 = vmatpush.bf16.msra.mxu0 %v107
    %117 = vmatpush.bf16.msra.mxu0 %v106
    %118 = vmatpush.bf16.msra.mxu0 %v105
    %119 = vmatpush.bf16.msra.mxu0 %v104
    %120 = vmatpush.bf16.msra.mxu0 %v103
    %121 = vmatpush.bf16.msra.mxu0 %v102
    %122 = vmatpush.bf16.msra.mxu0 %v101
    %123 = vmatpush.bf16.msra.mxu0 %v100
    %124 = vmatmul.bf16.gmra.mxu0 %v66
    %v125 = vpop.f32.mrf.mxu0
    %v126 = vadd.f32 0.0, %v125
    %v127 = vpop.f32.mrf.mxu0
    %v128 = vadd.f32 0.0, %v127
    %129 = vdwg.mxu0
    %v130 = vpack.c.bf16 %v126, %v126
    %v131 = vpack.c.bf16 %v128, %v128
    %132 = vst [vmem:[#allocation7] sm:$0xf] %v130
    %133 = vst [vmem:[#allocation7 + $0x4] sm:$0xf] %v131
    // Predicated region
    $region18: #{tpu_custom_call.1} parent=1 // pred_check
      _
    $region19: #{tpu_custom_call.1} parent=1 // pred_check_branch
      %135 = sbr.rel (0) target = $region21
    $region20: #{tpu_custom_call.1} parent=1 // pred_region
      %137 = vsyncadd [#allocation4], 0
      %s138 = sshll.u32 [#allocation7], 4
      %s139 = int_to_ptr.vmem [resolvable:$true] %s138
      %s140 = sshll.u32 %s2, 4
      %s141 = int_to_ptr.hbm [resolvable:$true] %s140
      %146 = dma.vmem_to_hbm [thread:$0]  %s139, 128, %s141, [#allocation4], 64, 64, 4
    $region21: #{tpu_custom_call.1} parent=1 // pred_fallthru
      _
    // Predicated region
    $region22: #{tpu_custom_call.1} parent=1 // pred_check
      _
    $region23: #{tpu_custom_call.1} parent=1 // pred_check_branch
      %148 = sbr.rel (0) target = $region25
    $region24: #{tpu_custom_call.1} parent=1 // pred_region
      %150 = dma.done [#allocation4], 128
    $region25: #{tpu_custom_call.1} parent=1 // pred_fallthru
      _
    %151 = vsyncpa [#allocation3], 1
    %152 = vsyncpa [#allocation6], 1
    %153 = vsyncpa [#allocation4], 1

</llo_original>
